<compile_context>
chip_gen: v5e
topology: v5e:2x2
jax: 0.10.0
libtpu: 0.0.40
codegen_flags: <defaults>
</compile_context>

<pallas_src>
import jax
import jax.numpy as jnp
from jax import lax
from jax.experimental import pallas as pl
from jax.experimental.pallas import tpu as pltpu


def _irm_fwd_kernel(x_ref, phi_w_ref, w_row_ref, o_ref):
    # x_ref:     (B, D)  one environment's batch (leading env axis squeezed)
    # phi_w_ref: (D, D)  PyTorch Linear layout (out_features, in_features)
    # w_row_ref: (1, D)  fixed classifier, lane-dense row
    # o_ref:     (B, 1)  output
    phi_w = phi_w_ref[...]
    if phi_w.dtype != jnp.float32:              # trace-time; no-op for f32
        phi_w = phi_w.astype(jnp.float32)
    w_row = w_row_ref[...]
    if w_row.dtype != jnp.float32:
        w_row = w_row.astype(jnp.float32)

    # Fused classifier vector v[0, d] = sum_o phi_w[o, d] * w[o]:
    # one native (1, D) @ (D, D) MXU pass, kept lane-dense.
    v = lax.dot_general(
        w_row, phi_w,
        dimension_numbers=(((1,), (0,)), ((), ())),
        preferred_element_type=jnp.float32,
    )                                            # (1, D)

    x = x_ref[...]
    if x.dtype != jnp.float32:                   # matches x.float() in torch
        x = x.astype(jnp.float32)

    # y = x @ v^T.  x stays in native (M, K) orientation (contraction on its
    # last dim); only the tiny (1, D) row needs a transposed feed.  The
    # (B, 1) result is a cheap masked store (B/8 vst.msk).
    o_ref[...] = lax.dot_general(
        x, v,
        dimension_numbers=(((1,), (1,)), ((), ())),
        preferred_element_type=jnp.float32,
    )                                            # (B, 1)


def irm_forward(x, phi_w, w):
    """Pallas forward of ModelModule: (x @ phi_w.T) @ w == x @ (phi_w.T @ w).

    x may be (B, D) (single forward) or (E, B, D) (E stacked environments /
    batches amortizing the pallas_call fixed cost).  Returns (B, 1) or
    (E, B, 1) float32.
    """
    squeeze_env = x.ndim == 2
    if squeeze_env:
        x = x[None]                              # (1, B, D)
    E, B, D = x.shape
    assert phi_w.shape == (D, D)
    assert w.shape == (D, 1)

    # Lane-dense classifier row (cheap wrapper-side relayout of D elements).
    w_row = w.reshape(1, D)

    flops = E * (2 * D * D + 2 * B * D)
    bytes_accessed = (E * B * D * x.dtype.itemsize
                      + D * D * phi_w.itemsize + D * w.dtype.itemsize
                      + E * B * 4)

    out = pl.pallas_call(
        _irm_fwd_kernel,
        out_shape=jax.ShapeDtypeStruct((E, B, 1), jnp.float32),
        grid=(E,),
        in_specs=[
            # Per-environment x tile; env axis squeezed out of the kernel ref.
            pl.BlockSpec((pl.Squeezed(), B, D), lambda e: (e, 0, 0)),
            # Constant block index across the grid -> single DMA, stays
            # resident in VMEM for all E environments.
            pl.BlockSpec((D, D), lambda e: (0, 0)),
            pl.BlockSpec((1, D), lambda e: (0, 0)),
        ],
        out_specs=pl.BlockSpec((pl.Squeezed(), B, 1), lambda e: (e, 0, 0)),
        compiler_params=pltpu.CompilerParams(
            # Environments are independent: shard across v7x's 2 TensorCores.
            dimension_semantics=("parallel",),
        ),
        cost_estimate=pl.CostEstimate(
            flops=flops, transcendentals=0, bytes_accessed=bytes_accessed),
    )(x, phi_w, w_row)

    return out[0] if squeeze_env else out


if __name__ == "__main__":
    key = jax.random.PRNGKey(0)
    k_x, k_phi = jax.random.split(key)

    E = 4        # stacked IRM environments (amortizes per-call fixed cost)
    B = 8        # batch per environment
    D = 32       # input_size / feature dim

    # Deterministic synthetic parameters (no checkpoint loading).
    xs = jax.random.normal(k_x, (E, B, D), dtype=jnp.float32)
    phi_w = jax.random.normal(k_phi, (D, D), dtype=jnp.float32) * 0.1
    w = jnp.ones((D, 1), dtype=jnp.float32)     # IRM fixed "dummy" classifier

    fwd = jax.jit(irm_forward)

    # Stacked-environments path (one pallas_call for all E forwards).
    out_stacked = jax.block_until_ready(fwd(xs, phi_w, w))
    ref_stacked = jnp.einsum("ebd,od->ebo", xs, phi_w) @ w   # (x @ phi_w.T) @ w
    assert out_stacked.shape == (E, B, 1)
    assert jnp.allclose(out_stacked, ref_stacked, atol=1e-4, rtol=1e-4)

    # Single-batch path (module's forward(x) signature).
    out_single = jax.block_until_ready(fwd(xs[0], phi_w, w))
    ref_single = (xs[0] @ phi_w.T) @ w
    assert out_single.shape == (B, 1)
    assert jnp.allclose(out_single, ref_single, atol=1e-4, rtol=1e-4)

    # TODO(synk): non-forward methods (optimizer state (de)serialization,
    # tensor-dict plumbing, solution()/results()) are host-side bookkeeping
    # with no kernel equivalent and are intentionally not implemented.
    print("KERNEL_OK")
</pallas_src>

<mosaic_0001>
module attributes {stable_mosaic.version = 11 : i64} {
  func.func @_irm_fwd_kernel(%arg0: i32, %arg1: memref<1x8x32xf32, #tpu.memory_space<vmem>>, %arg2: memref<32x32xf32, #tpu.memory_space<vmem>>, %arg3: memref<1x32xf32, #tpu.memory_space<vmem>>, %arg4: memref<1x8x1xf32, #tpu.memory_space<vmem>>) attributes {dimension_semantics = [#tpu.dimension_semantics<parallel>], iteration_bounds = array<i64: 4>, scalar_prefetch = 0 : i64, scratch_operands = 0 : i64, tpu.core_type = #tpu.core_type<tc>, window_params = [{transform_indices = @transform_0, window_bounds = array<i64: 1, 8, 32>}, {pipeline_mode = #tpu.pipeline_mode<synchronous>, transform_indices = @transform_1, window_bounds = array<i64: 32, 32>}, {pipeline_mode = #tpu.pipeline_mode<synchronous>, transform_indices = @transform_2, window_bounds = array<i64: 1, 32>}, {transform_indices = @transform_3, window_bounds = array<i64: 1, 8, 1>}]} {
    %c0 = arith.constant 0 : index
    %c0_0 = arith.constant 0 : index
    %0 = vector.load %arg2[%c0, %c0_0] : memref<32x32xf32, #tpu.memory_space<vmem>>, vector<32x32xf32>
    %c0_1 = arith.constant 0 : index
    %c0_2 = arith.constant 0 : index
    %1 = vector.load %arg3[%c0_1, %c0_2] : memref<1x32xf32, #tpu.memory_space<vmem>>, vector<1x32xf32>
    %cst = arith.constant dense<0.000000e+00> : vector<1x32xf32>
    %2 = tpu.matmul %1, %0, %cst {dimension_numbers = #tpu.dot_dimension_numbers<[1], [0], [0], [1], [0, 0, 1, 1], [], []>} : vector<1x32xf32>, vector<32x32xf32>, vector<1x32xf32> -> vector<1x32xf32>
    %c0_3 = arith.constant 0 : index
    %c0_4 = arith.constant 0 : index
    %c0_5 = arith.constant 0 : index
    %3 = vector.load %arg1[%c0_3, %c0_4, %c0_5] : memref<1x8x32xf32, #tpu.memory_space<vmem>>, vector<1x8x32xf32>
    %4 = vector.shape_cast %3 : vector<1x8x32xf32> to vector<8x32xf32>
    %cst_6 = arith.constant dense<0.000000e+00> : vector<8x1xf32>
    %5 = tpu.matmul %4, %2, %cst_6 {dimension_numbers = #tpu.dot_dimension_numbers<[1], [1], [0], [0], [0, 0, 1, 0], [], []>} : vector<8x32xf32>, vector<1x32xf32>, vector<8x1xf32> -> vector<8x1xf32>
    %c0_7 = arith.constant 0 : index
    %c0_8 = arith.constant 0 : index
    %c0_9 = arith.constant 0 : index
    %6 = vector.load %arg4[%c0_7, %c0_8, %c0_9] : memref<1x8x1xf32, #tpu.memory_space<vmem>>, vector<1x8x1xf32>
    %7 = vector.shape_cast %6 : vector<1x8x1xf32> to vector<8x1xf32>
    %8 = vector.shape_cast %5 : vector<8x1xf32> to vector<1x8x1xf32>
    tpu.vector_store %arg4[%c0_7, %c0_8, %c0_9], %8 {strides = array<i32>} : memref<1x8x1xf32, #tpu.memory_space<vmem>>, vector<1x8x1xf32>,
    return
  }
  func.func @transform_0(%arg0: i32) -> (i32, i32, i32) {
    %c0_i32 = arith.constant 0 : i32
    %c0_i32_0 = arith.constant 0 : i32
    %c0_i32_1 = arith.constant 0 : i32
    return %arg0, %c0_i32, %c0_i32_0 : i32, i32, i32
  }
  func.func @transform_1(%arg0: i32) -> (i32, i32) {
    %c0_i32 = arith.constant 0 : i32
    %c0_i32_0 = arith.constant 0 : i32
    %c0_i32_1 = arith.constant 0 : i32
    return %c0_i32, %c0_i32_0 : i32, i32
  }
  func.func @transform_2(%arg0: i32) -> (i32, i32) {
    %c0_i32 = arith.constant 0 : i32
    %c0_i32_0 = arith.constant 0 : i32
    %c0_i32_1 = arith.constant 0 : i32
    return %c0_i32, %c0_i32_0 : i32, i32
  }
  func.func @transform_3(%arg0: i32) -> (i32, i32, i32) {
    %c0_i32 = arith.constant 0 : i32
    %c0_i32_0 = arith.constant 0 : i32
    %c0_i32_1 = arith.constant 0 : i32
    return %arg0, %c0_i32, %c0_i32_0 : i32, i32, i32
  }
}

</mosaic_0001>

<llo_original>
// kernel: irm_forward.1
$region0: #{irm_forward.1}
  #allocation0 [shape = 'u32[]', space=smem, size = 0x4, offset = 0x4, fixed_abs, tag = 'smem constant byte address 0x4 - core index']
  #allocation1 [shape = 'u32[72,128]{1,0:T(1,128)}', space=vmem, size = 0x9000, scoped, tag = 'internal scratch']
  %s0 = inlined_call_operand.hbm [shape: f32[4,8,32], index: 0, kind: input, shape index: {}]
  %s1 = inlined_call_operand.hbm [shape: f32[32,32], index: 1, kind: input, shape index: {}]
  %s2 = inlined_call_operand.vmem [shape: f32[1,32], index: 2, kind: input, shape index: {}]
  %s3 = inlined_call_operand.vmem [shape: f32[4,8,1], index: 3, kind: output, shape index: {}]
  %s4 = sld [smem:[#allocation0]]
  $region53: #{irm_forward.1} parent=0
    _
  %s6 = ssub.s32 1, %s4
  %s7 = scalar_select 0, %s6, %s4
  $region1: #{irm_forward.1} parent=0
    #allocation2 [shape = 'u8[8192]{0}', space=vmem, size = 0x2000, scoped, tag = 'input window, operand 0']
    #allocation3 [shape = 's32[2]{0}', space=sflag, size = 0x8, scoped, tag = 'scoped memory for irm_forward.1']
    #allocation4 [shape = 'u8[16384]{0}', space=vmem, size = 0x4000, scoped, tag = 'input window, operand 1, single buffered']
    #allocation5 [shape = 's32[1]{0}', space=sflag, size = 0x4, scoped, tag = 'scoped memory for irm_forward.1']
    %8 = vsyncpa [#allocation3], 0
    %s9 = scalar_lea.sflag [#allocation3], 1
    %10 = vsyncpa %s9, 0
    %11 = vsyncpa [#allocation5], 0
    loop: start=0, step=1, limit=6
    $region2: #{irm_forward.1} parent=1 // loop_pre_header
      _
    $region3: #{irm_forward.1} parent=1 // loop_header
      %s13 = sphi 0, %s17
      %p14 = scmp.ge.s32.totalorder %s13, 6
      %s23 = sphi 0, %s25
      %s26 = sphi 0, %s23
      %s27 = sphi 0, %s26
      %s43 = sphi 0, %s27
      %s47 = sphi 0, %s47
      %s49 = sphi 0, %s47
      %s50 = sphi 0, %s49
      %s64 = sphi 0, %s50
      %s68 = sphi 0, %s68
      %s70 = sphi 0, %s68
      %s71 = sphi 0, %s70
      %s85 = sphi 0, %s71
      %s91 = sphi 0, %s93
      %s94 = sphi 0, %s91
      %s95 = sphi 0, %s94
      %s111 = sphi 0, %s95
    $region4: #{irm_forward.1} parent=1 // loop_header_branch
      %16 = sbr.rel (%p14) target = $region8
    $region5: #{irm_forward.1} parent=1 // loop_body
      %s18 = ssub.s32 %s13, 1
      %s19 = ssub.s32 %s13, 2
      %s20 = sadd.s32 %s13, 1
      %s21 = ssub.s32 %s13, %s20
      %p22 = scmp.eq.s32.totalorder %s21, 0
      %s24 = sadd.s32 %s23, 1
      %s25 = scalar_select %p22, %s23, %s24
      %p28 = pneg %p22
      %p29 = scmp.eq.s32.totalorder %s13, 3
      %p30 = por %p28, %p29
      %p31 = scmp.ne.s32.totalorder %s23, %s26
      %p32 = scmp.eq.s32.totalorder %s13, 0
      %p33 = por %p31, %p32
      %p34 = scmp.ne.s32.totalorder %s23, %s26
      %p35 = scmp.eq.s32.totalorder %s18, 3
      %p36 = por %p34, %p35
      %p37 = scmp.ne.s32.totalorder %s26, %s27
      %p38 = scmp.eq.s32.totalorder %s18, 0
      %p39 = por %p37, %p38
      %p40 = scmp.ne.s32.totalorder %s26, %s27
      %p41 = scmp.eq.s32.totalorder %s19, 3
      %p42 = por %p40, %p41
      %p44 = scmp.ne.s32.totalorder %s27, %s43
      %p45 = scmp.eq.s32.totalorder %s19, 0
      %p46 = por %p44, %p45
      %s48 = sadd.s32 %s47, 1
      %p51 = scmp.eq.s32.totalorder %s13, 3
      %p52 = scmp.ne.s32.totalorder %s47, %s49
      %p53 = scmp.eq.s32.totalorder %s13, 0
      %p54 = por %p52, %p53
      %p55 = scmp.ne.s32.totalorder %s47, %s49
      %p56 = scmp.eq.s32.totalorder %s18, 3
      %p57 = por %p55, %p56
      %p58 = scmp.ne.s32.totalorder %s49, %s50
      %p59 = scmp.eq.s32.totalorder %s18, 0
      %p60 = por %p58, %p59
      %p61 = scmp.ne.s32.totalorder %s49, %s50
      %p62 = scmp.eq.s32.totalorder %s19, 3
      %p63 = por %p61, %p62
      %p65 = scmp.ne.s32.totalorder %s50, %s64
      %p66 = scmp.eq.s32.totalorder %s19, 0
      %p67 = por %p65, %p66
      %s69 = sadd.s32 %s68, 1
      %p72 = scmp.eq.s32.totalorder %s13, 3
      %p73 = scmp.ne.s32.totalorder %s68, %s70
      %p74 = scmp.eq.s32.totalorder %s13, 0
      %p75 = por %p73, %p74
      %p76 = scmp.ne.s32.totalorder %s68, %s70
      %p77 = scmp.eq.s32.totalorder %s18, 3
      %p78 = por %p76, %p77
      %p79 = scmp.ne.s32.totalorder %s70, %s71
      %p80 = scmp.eq.s32.totalorder %s18, 0
      %p81 = por %p79, %p80
      %p82 = scmp.ne.s32.totalorder %s70, %s71
      %p83 = scmp.eq.s32.totalorder %s19, 3
      %p84 = por %p82, %p83
      %p86 = scmp.ne.s32.totalorder %s71, %s85
      %p87 = scmp.eq.s32.totalorder %s19, 0
      %p88 = por %p86, %p87
      %s89 = ssub.s32 %s13, %s20
      %p90 = scmp.eq.s32.totalorder %s89, 0
      %s92 = sadd.s32 %s91, 1
      %s93 = scalar_select %p90, %s91, %s92
      %p96 = pneg %p90
      %p97 = scmp.eq.s32.totalorder %s13, 3
      %p98 = por %p96, %p97
      %p99 = scmp.ne.s32.totalorder %s91, %s94
      %p100 = scmp.eq.s32.totalorder %s13, 0
      %p101 = por %p99, %p100
      %p102 = scmp.ne.s32.totalorder %s91, %s94
      %p103 = scmp.eq.s32.totalorder %s18, 3
      %p104 = por %p102, %p103
      %p105 = scmp.ne.s32.totalorder %s94, %s95
      %p106 = scmp.eq.s32.totalorder %s18, 0
      %p107 = por %p105, %p106
      %p108 = scmp.ne.s32.totalorder %s94, %s95
      %p109 = scmp.eq.s32.totalorder %s19, 3
      %p110 = por %p108, %p109
      %p112 = scmp.ne.s32.totalorder %s95, %s111
      %p113 = scmp.eq.s32.totalorder %s19, 0
      %p114 = por %p112, %p113
      %p115 = scmp.le.s32.totalorder 1, %s13
      %p116 = scmp.lt.s32.totalorder %s13, 5
      %p117 = pnand %p115, %p116
      %p118 = pneg %p117
      // Predicated region
      $region9: #{irm_forward.1} parent=5 // pred_check
        _
      $region10: #{irm_forward.1} parent=5 // pred_check_branch
        %120 = sbr.rel (%p117) target = $region12
      $region11: #{irm_forward.1} parent=5 // pred_region
        %s121 = ssub.s32 %s13, 1
        // Predicated region
        $region13: #{irm_forward.1} parent=11 // pred_check
          %p122 = pneg %p60
        $region14: #{irm_forward.1} parent=11 // pred_check_branch
          %124 = sbr.rel (%p122) target = $region16
        $region15: #{irm_forward.1} parent=11 // pred_region
          %126 = vsyncadd [#allocation5], 0
          %s127 = sshll.u32 %s1, 4
          %s128 = int_to_ptr.hbm [resolvable:$true] %s127
          %s129 = sshll.u32 [#allocation4], 4
          %s130 = int_to_ptr.vmem [resolvable:$true] %s129
          %135 = dma.hbm_to_vmem [thread:$0]  %s128, 512, %s130, [#allocation5], 128, 128, 8
        $region16: #{irm_forward.1} parent=11 // pred_fallthru
          _
        // Predicated region
        $region17: #{irm_forward.1} parent=11 // pred_check
          %p136 = pneg %p81
        $region18: #{irm_forward.1} parent=11 // pred_check_branch
          %138 = sbr.rel (%p136) target = $region20
        $region19: #{irm_forward.1} parent=11 // pred_region
          _
        $region20: #{irm_forward.1} parent=11 // pred_fallthru
          _
      $region12: #{irm_forward.1} parent=5 // pred_fallthru
        _
      %p139 = scmp.lt.s32.totalorder %s13, 4
      // Predicated region
      $region21: #{irm_forward.1} parent=5 // pred_check
        %p140 = pneg %p139
      $region22: #{irm_forward.1} parent=5 // pred_check_branch
        %142 = sbr.rel (%p140) target = $region24
      $region23: #{irm_forward.1} parent=5 // pred_region
        // Predicated region
        $region25: #{irm_forward.1} parent=23 // pred_check
          %p143 = pneg %p33
        $region26: #{irm_forward.1} parent=23 // pred_check_branch
          %145 = sbr.rel (%p143) target = $region28
        $region27: #{irm_forward.1} parent=23 // pred_region
          %s146 = sand.u32 %s23, 1
          %s147 = scalar_lea.sflag [#allocation3], %s146
          %s148 = sand.u32 %s23, 1
          %s149 = smul.addr %s148, 8
          %s150 = scalar_lea.vmem [#allocation2], %s149
          %152 = vsyncadd %s147, 0
          %s153 = smul.addr %s13, 8
          %s154 = scalar_lea.hbm %s0, %s153
          %s156 = sshll.u32 %s154, 4
          %s157 = int_to_ptr.hbm [resolvable:$true] %s156
          %s158 = sshll.u32 %s150, 4
          %s159 = int_to_ptr.vmem [resolvable:$true] %s158
          %161 = dma.hbm_to_vmem [thread:$0]  %s157, 128, %s159, %s147
        $region28: #{irm_forward.1} parent=23 // pred_fallthru
          _
      $region24: #{irm_forward.1} parent=5 // pred_fallthru
        _
      %p162 = scmp.le.s32.totalorder 1, %s13
      %p163 = scmp.lt.s32.totalorder %s13, 5
      %p164 = pnand %p162, %p163
      %p165 = pneg %p164
      // Predicated region
      $region29: #{irm_forward.1} parent=5 // pred_check
        _
      $region30: #{irm_forward.1} parent=5 // pred_check_branch
        %167 = sbr.rel (%p164) target = $region32
      $region31: #{irm_forward.1} parent=5 // pred_region
        %s168 = ssub.s32 %s13, 1
        %s169 = sand.u32 %s26, 1
        %s170 = scalar_lea.sflag [#allocation3], %s169
        %s171 = sand.u32 %s26, 1
        %s172 = smul.addr %s171, 8
        %s173 = scalar_lea.vmem [#allocation2], %s172
        // Predicated region
        $region33: #{irm_forward.1} parent=31 // pred_check
          %p174 = pneg %p39
        $region34: #{irm_forward.1} parent=31 // pred_check_branch
          %176 = sbr.rel (%p174) target = $region36
        $region35: #{irm_forward.1} parent=31 // pred_region
          %178 = dma.done %s170, 128
        $region36: #{irm_forward.1} parent=31 // pred_fallthru
          _
        // Predicated region
        $region37: #{irm_forward.1} parent=31 // pred_check
          %p179 = pneg %p60
        $region38: #{irm_forward.1} parent=31 // pred_check_branch
          %181 = sbr.rel (%p179) target = $region40
        $region39: #{irm_forward.1} parent=31 // pred_region
          %183 = dma.done [#allocation5], 512
        $region40: #{irm_forward.1} parent=31 // pred_fallthru
          _
        %s184 = sand.u32 %s26, 1
        %s185 = scalar_lea.sflag [#allocation3], %s184
        %s186 = sand.u32 %s26, 1
        %s187 = smul.addr %s186, 8
        %s188 = scalar_lea.vmem [#allocation2], %s187
        %p189 = pneg %p39
        %p190 = pneg %p36
        %p191 = pneg %p60
        %p192 = pneg %p57
        %p193 = pneg %p81
        %p194 = pneg %p78
        %p195 = pneg %p107
        %p196 = pneg %p104
        %p197 = scmp.lt.s32.totalorder %s18, 3
        %s198 = scalar_select %p197, %s18, 3
        %s199 = smul.addr %s198, 8
        %s200 = scalar_lea.vmem %s3, %s199
        %p201 = scmp.lt.s32.totalorder %s18, 3
        %s202 = scalar_select %p201, %s18, 3
        %s203 = smul.addr %s202, 8
        %s204 = scalar_lea.vmem %s3, %s203
        %v205 = vld [vmem:[#allocation4] sm:$0xff]
        %v206 = vld [vmem:[#allocation4 + $0x8] sm:$0xff]
        %v207 = vld [vmem:[#allocation4 + $0x10] sm:$0xff]
        %v208 = vld [vmem:[#allocation4 + $0x18] sm:$0xff]
        %v209 = vld [vmem:[%s2] sm:$0x1]
        %vm210 = vcmask 261120
        %v212 = vsel %vm210, %v209, 0
        %214 = vmatpush.msra.mxu0 0.0
        %215 = vmatpush.msra.mxu0 0.0
        %216 = vmatpush.msra.mxu0 0.0
        %217 = vmatpush.msra.mxu0 0.0
        %218 = vmatpush.msra.mxu0 0.0
        %219 = vmatpush.msra.mxu0 0.0
        %220 = vmatpush.msra.mxu0 0.0
        %221 = vmatpush.msra.mxu0 0.0
        %222 = vmatpush.msra.mxu0 0.0
        %223 = vmatpush.msra.mxu0 0.0
        %224 = vmatpush.msra.mxu0 0.0
        %225 = vmatpush.msra.mxu0 0.0
        %226 = vmatpush.msra.mxu0 %v208
        %227 = vmatpush.msra.mxu0 %v207
        %228 = vmatpush.msra.mxu0 %v206
        %229 = vmatpush.msra.mxu0 %v205
        %230 = vmatmul.f32.gmra.mxu0 %v212
        %v231 = vpop.f32.mrf.mxu0
        %v232 = vadd.f32 0.0, %v231
        %233 = vdwg.mxu0
        %v234 = vld [vmem:[%s173] sm:$0xff]
        %v235 = vperm.slane %v232, 0
        %v236 = vmul.f32 %v234, %v235
        %v237 = vsel %vm210, %v236, 0.0
        %238 = vadd.xlane.f32.xlu0 %v237
        %v239 = vpop.xlane.xlu0 %238
        %vm240 = vcmask 7168
        %241 = vst.msk [vmem:[%s204] sm:$0xff] %vm240, %v239
        %p242 = scmp.lt.s32.totalorder %s18, 3
        %s243 = scalar_select %p242, %s18, 3
        %s244 = smul.addr %s243, 8
        %s245 = scalar_lea.vmem %s3, %s244
        // Predicated region
        $region41: #{irm_forward.1} parent=31 // pred_check
          %p246 = pneg %p104
        $region42: #{irm_forward.1} parent=31 // pred_check_branch
          %248 = sbr.rel (%p246) target = $region44
        $region43: #{irm_forward.1} parent=31 // pred_region
          _
        $region44: #{irm_forward.1} parent=31 // pred_fallthru
          _
      $region32: #{irm_forward.1} parent=5 // pred_fallthru
        _
      %p249 = scmp.le.s32.totalorder 2, %s13
      // Predicated region
      $region45: #{irm_forward.1} parent=5 // pred_check
        %p250 = pneg %p249
      $region46: #{irm_forward.1} parent=5 // pred_check_branch
        %252 = sbr.rel (%p250) target = $region48
      $region47: #{irm_forward.1} parent=5 // pred_region
        %s253 = ssub.s32 %s13, 2
        // Predicated region
        $region49: #{irm_forward.1} parent=47 // pred_check
          %p254 = pneg %p110
        $region50: #{irm_forward.1} parent=47 // pred_check_branch
          %256 = sbr.rel (%p254) target = $region52
        $region51: #{irm_forward.1} parent=47 // pred_region
          %p257 = scmp.lt.s32.totalorder %s19, 3
          %s258 = scalar_select %p257, %s19, 3
          %s259 = smul.addr %s258, 8
          %s260 = scalar_lea.vmem %s3, %s259
        $region52: #{irm_forward.1} parent=47 // pred_fallthru
          _
      $region48: #{irm_forward.1} parent=5 // pred_fallthru
        _
    $region6: #{irm_forward.1} parent=1 // loop_footer
      %s17 = sadd.s32 1, %s13
    $region7: #{irm_forward.1} parent=1 // loop_footer_branch
      %12 = sbr.rel target = $region3
    $region8: #{irm_forward.1} parent=1 // loop_exit
      _
    %261 = vsyncpa [#allocation3], 1
    %s262 = scalar_lea.sflag [#allocation3], 1
    %263 = vsyncpa %s262, 1
    %264 = vsyncpa [#allocation5], 1

</llo_original>
